<compile_context>
chip_gen: v7x
topology: tpu7x:2x2x1
jax: 0.10.0
libtpu: 0.0.40
codegen_flags: <defaults>
</compile_context>

<pallas_src>
import functools

import jax
import jax.numpy as jnp
from jax import lax
from jax.experimental import pallas as pl
from jax.experimental.pallas import tpu as pltpu


def _image_proj_kernel(x_ref, w_ref, b_ref, g_ref, beta_ref, o_ref, *, eps):
    """One extra-context token per grid step.

    x_ref:    (B, C)      VMEM (resident across the grid)
    w_ref:    (1, C, D)   VMEM (per-token weight slab, double-buffered)
    b_ref:    (1, 1, D)   VMEM (per-token bias)
    g_ref:    (1, D)      VMEM (LayerNorm gamma)
    beta_ref: (1, D)      VMEM (LayerNorm beta)
    o_ref:    (1, B, D)   VMEM (per-token output block, lane-dense store)
    """
    x = x_ref[...]                                   # (B, C) native dtype
    w = w_ref[0]                                     # (C, D) native dtype
    b = b_ref[0].astype(jnp.float32)                 # (1, D)
    gamma = g_ref[...].astype(jnp.float32)           # (1, D)
    beta = beta_ref[...].astype(jnp.float32)         # (1, D)

    # Linear: MXU matmul with f32 accumulation + bias.
    y = jnp.dot(x, w, preferred_element_type=jnp.float32) + b      # (B, D) f32

    # LayerNorm over D, single-pass variance + fused scale-and-shift.
    d_inv = 1.0 / y.shape[-1]
    mean = jnp.sum(y, axis=-1, keepdims=True) * d_inv               # (B, 1)
    mean_sq = jnp.sum(y * y, axis=-1, keepdims=True) * d_inv        # (B, 1)
    var = mean_sq - mean * mean
    a = gamma * lax.rsqrt(var + eps)                                # (B, D)
    c = beta - mean * a                                             # (B, D)
    out = y * a + c                                                 # (B, D)

    o_ref[0] = out.astype(o_ref.dtype)               # full lane-dense block store


def prepare_image_proj_params(proj_w, proj_b, ln_gamma, ln_beta,
                              *, clip_extra_context_tokens, cross_attention_dim,
                              param_dtype=None):
    """One-time parameter repack (hoisted out of the per-call path).

    proj_w: (T * D, C)  -- PyTorch nn.Linear weight layout (out_features, in_features)
    proj_b: (T * D,)
    ln_gamma/ln_beta: (D,)
    Returns (w_k, b_k, g_k, beta_k) with shapes (T, C, D), (T, 1, D), (1, D), (1, D).
    """
    T = clip_extra_context_tokens
    D = cross_attention_dim
    C = proj_w.shape[1]
    # PyTorch Linear: y = x @ W.T + b, output index j = t*D + d  ->  w_k[t, c, d] = W[t*D+d, c]
    w_k = jnp.transpose(proj_w.reshape(T, D, C), (0, 2, 1))   # (T, C, D)
    b_k = proj_b.reshape(T, 1, D)
    g_k = ln_gamma.reshape(1, D)
    beta_k = ln_beta.reshape(1, D)
    if param_dtype is not None:                               # e.g. jnp.bfloat16 to halve weight HBM traffic
        w_k = w_k.astype(param_dtype)
        b_k = b_k.astype(param_dtype)
    return w_k, b_k, g_k, beta_k


def image_proj_forward(image_embeds, w_k, b_k, g_k, beta_k, *, eps=1e-5):
    """Forward pass: (B, C) -> (B, T, D), equivalent to ImageProjModel.forward."""
    B, C = image_embeds.shape
    T, _, D = w_k.shape

    kernel = functools.partial(_image_proj_kernel, eps=eps)

    out_tbd = pl.pallas_call(
        kernel,
        out_shape=jax.ShapeDtypeStruct((T, B, D), image_embeds.dtype),
        grid_spec=pltpu.PrefetchScalarGridSpec(
            num_scalar_prefetch=0,
            grid=(T,),
            in_specs=[
                pl.BlockSpec((B, C), lambda t: (0, 0)),        # x, resident
                pl.BlockSpec((1, C, D), lambda t: (t, 0, 0)),  # per-token weight slab
                pl.BlockSpec((1, 1, D), lambda t: (t, 0, 0)),  # per-token bias
                pl.BlockSpec((1, D), lambda t: (0, 0)),        # gamma, resident
                pl.BlockSpec((1, D), lambda t: (0, 0)),        # beta, resident
            ],
            out_specs=pl.BlockSpec((1, B, D), lambda t: (t, 0, 0)),
        ),
        compiler_params=pltpu.CompilerParams(
            dimension_semantics=("parallel",),   # shard token steps across TCs on v7x
        ),
    )(image_embeds, w_k, b_k, g_k, beta_k)

    # Cheap layout glue back to the module's (B, T, D) output.
    return jnp.transpose(out_tbd, (1, 0, 2))


def _reference(image_embeds, proj_w, proj_b, ln_gamma, ln_beta, *, T, D, eps=1e-5):
    y = image_embeds @ proj_w.T + proj_b
    y = y.reshape(-1, T, D)
    mean = jnp.mean(y, axis=-1, keepdims=True)
    var = jnp.mean(jnp.square(y - mean), axis=-1, keepdims=True)
    return (y - mean) / jnp.sqrt(var + eps) * ln_gamma + ln_beta


if __name__ == "__main__":
    # Small shapes consistent with the module's forward.
    B = 2
    clip_embeddings_dim = 64
    cross_attention_dim = 128
    clip_extra_context_tokens = 4

    key = jax.random.PRNGKey(0)
    k_x, k_w, k_b = jax.random.split(key, 3)

    image_embeds = jax.random.normal(k_x, (B, clip_embeddings_dim), dtype=jnp.float32)

    # Deterministic synthetic parameters (shapes from ImageProjModel.__init__).
    proj_w = jax.random.normal(
        k_w, (clip_extra_context_tokens * cross_attention_dim, clip_embeddings_dim),
        dtype=jnp.float32) * 0.02
    proj_b = jax.random.normal(
        k_b, (clip_extra_context_tokens * cross_attention_dim,), dtype=jnp.float32) * 0.01
    ln_gamma = jnp.ones((cross_attention_dim,), dtype=jnp.float32)
    ln_beta = jnp.zeros((cross_attention_dim,), dtype=jnp.float32)

    # One-time parameter repack (init-time, not per-call).
    w_k, b_k, g_k, beta_k = prepare_image_proj_params(
        proj_w, proj_b, ln_gamma, ln_beta,
        clip_extra_context_tokens=clip_extra_context_tokens,
        cross_attention_dim=cross_attention_dim,
    )

    out = image_proj_forward(image_embeds, w_k, b_k, g_k, beta_k)
    out = jax.block_until_ready(out)

    ref = _reference(image_embeds, proj_w, proj_b, ln_gamma, ln_beta,
                     T=clip_extra_context_tokens, D=cross_attention_dim)

    assert out.shape == (B, clip_extra_context_tokens, cross_attention_dim)
    assert jnp.allclose(out, ref, atol=1e-4, rtol=1e-4), "mismatch vs reference"

    print("KERNEL_OK")
</pallas_src>

<mosaic_0001>
module attributes {stable_mosaic.version = 11 : i64} {
  func.func @_image_proj_kernel(%arg0: i32, %arg1: memref<2x64xf32, #tpu.memory_space<vmem>>, %arg2: memref<1x64x128xf32, #tpu.memory_space<vmem>>, %arg3: memref<1x1x128xf32, #tpu.memory_space<vmem>>, %arg4: memref<1x128xf32, #tpu.memory_space<vmem>>, %arg5: memref<1x128xf32, #tpu.memory_space<vmem>>, %arg6: memref<1x2x128xf32, #tpu.memory_space<vmem>>) attributes {dimension_semantics = [#tpu.dimension_semantics<parallel>], iteration_bounds = array<i64: 4>, scalar_prefetch = 0 : i64, scratch_operands = 0 : i64, tpu.core_type = #tpu.core_type<tc>, window_params = [{pipeline_mode = #tpu.pipeline_mode<synchronous>, transform_indices = @transform_0, window_bounds = array<i64: 2, 64>}, {transform_indices = @transform_1, window_bounds = array<i64: 1, 64, 128>}, {transform_indices = @transform_2, window_bounds = array<i64: 1, 1, 128>}, {pipeline_mode = #tpu.pipeline_mode<synchronous>, transform_indices = @transform_3, window_bounds = array<i64: 1, 128>}, {pipeline_mode = #tpu.pipeline_mode<synchronous>, transform_indices = @transform_4, window_bounds = array<i64: 1, 128>}, {transform_indices = @transform_5, window_bounds = array<i64: 1, 2, 128>}]} {
    %c0 = arith.constant 0 : index
    %c0_0 = arith.constant 0 : index
    %0 = vector.load %arg1[%c0, %c0_0] : memref<2x64xf32, #tpu.memory_space<vmem>>, vector<2x64xf32>
    %c0_1 = arith.constant 0 : index
    %c0_2 = arith.constant 0 : index
    %c0_3 = arith.constant 0 : index
    %1 = vector.load %arg2[%c0_1, %c0_2, %c0_3] : memref<1x64x128xf32, #tpu.memory_space<vmem>>, vector<1x64x128xf32>
    %2 = vector.shape_cast %1 : vector<1x64x128xf32> to vector<64x128xf32>
    %c0_4 = arith.constant 0 : index
    %c0_5 = arith.constant 0 : index
    %c0_6 = arith.constant 0 : index
    %3 = vector.load %arg3[%c0_4, %c0_5, %c0_6] : memref<1x1x128xf32, #tpu.memory_space<vmem>>, vector<1x1x128xf32>
    %4 = vector.shape_cast %3 : vector<1x1x128xf32> to vector<1x128xf32>
    %c0_7 = arith.constant 0 : index
    %c0_8 = arith.constant 0 : index
    %5 = vector.load %arg4[%c0_7, %c0_8] : memref<1x128xf32, #tpu.memory_space<vmem>>, vector<1x128xf32>
    %c0_9 = arith.constant 0 : index
    %c0_10 = arith.constant 0 : index
    %6 = vector.load %arg5[%c0_9, %c0_10] : memref<1x128xf32, #tpu.memory_space<vmem>>, vector<1x128xf32>
    %cst = arith.constant dense<0.000000e+00> : vector<2x128xf32>
    %7 = tpu.matmul %0, %2, %cst {dimension_numbers = #tpu.dot_dimension_numbers<[1], [0], [0], [1], [0, 0, 1, 1], [], []>} : vector<2x64xf32>, vector<64x128xf32>, vector<2x128xf32> -> vector<2x128xf32>
    %8 = vector.broadcast %4 : vector<1x128xf32> to vector<2x128xf32>
    %9 = arith.addf %7, %8 : vector<2x128xf32>
    %cst_11 = arith.constant dense<0.000000e+00> : vector<2xf32>
    %10 = vector.multi_reduction <add>, %9, %cst_11 [1] : vector<2x128xf32> to vector<2xf32>
    %11 = vector.shape_cast %10 : vector<2xf32> to vector<2x1xf32>
    %cst_12 = arith.constant 7.812500e-03 : f32
    %12 = vector.broadcast %cst_12 : f32 to vector<2x1xf32>
    %13 = arith.mulf %11, %12 : vector<2x1xf32>
    %14 = arith.mulf %9, %9 : vector<2x128xf32>
    %cst_13 = arith.constant dense<0.000000e+00> : vector<2xf32>
    %15 = vector.multi_reduction <add>, %14, %cst_13 [1] : vector<2x128xf32> to vector<2xf32>
    %16 = vector.shape_cast %15 : vector<2xf32> to vector<2x1xf32>
    %cst_14 = arith.constant 7.812500e-03 : f32
    %17 = vector.broadcast %cst_14 : f32 to vector<2x1xf32>
    %18 = arith.mulf %16, %17 : vector<2x1xf32>
    %19 = arith.mulf %13, %13 : vector<2x1xf32>
    %20 = arith.subf %18, %19 : vector<2x1xf32>
    %cst_15 = arith.constant 9.99999974E-6 : f32
    %21 = vector.broadcast %cst_15 : f32 to vector<2x1xf32>
    %22 = arith.addf %20, %21 : vector<2x1xf32>
    %23 = math.rsqrt %22 : vector<2x1xf32>
    %24 = vector.broadcast %5 : vector<1x128xf32> to vector<2x128xf32>
    %25 = vector.broadcast %23 : vector<2x1xf32> to vector<2x128xf32>
    %26 = arith.mulf %24, %25 : vector<2x128xf32>
    %27 = vector.broadcast %13 : vector<2x1xf32> to vector<2x128xf32>
    %28 = arith.mulf %27, %26 : vector<2x128xf32>
    %29 = vector.broadcast %6 : vector<1x128xf32> to vector<2x128xf32>
    %30 = arith.subf %29, %28 : vector<2x128xf32>
    %31 = arith.mulf %9, %26 : vector<2x128xf32>
    %32 = arith.addf %31, %30 : vector<2x128xf32>
    %c0_16 = arith.constant 0 : index
    %c0_17 = arith.constant 0 : index
    %c0_18 = arith.constant 0 : index
    %33 = vector.load %arg6[%c0_16, %c0_17, %c0_18] : memref<1x2x128xf32, #tpu.memory_space<vmem>>, vector<1x2x128xf32>
    %34 = vector.shape_cast %33 : vector<1x2x128xf32> to vector<2x128xf32>
    %35 = vector.shape_cast %32 : vector<2x128xf32> to vector<1x2x128xf32>
    tpu.vector_store %arg6[%c0_16, %c0_17, %c0_18], %35 {strides = array<i32>} : memref<1x2x128xf32, #tpu.memory_space<vmem>>, vector<1x2x128xf32>,
    return
  }
  func.func @transform_0(%arg0: i32) -> (i32, i32) {
    %c0_i32 = arith.constant 0 : i32
    %c0_i32_0 = arith.constant 0 : i32
    %c0_i32_1 = arith.constant 0 : i32
    return %c0_i32, %c0_i32_0 : i32, i32
  }
  func.func @transform_1(%arg0: i32) -> (i32, i32, i32) {
    %c0_i32 = arith.constant 0 : i32
    %c0_i32_0 = arith.constant 0 : i32
    %c0_i32_1 = arith.constant 0 : i32
    return %arg0, %c0_i32, %c0_i32_0 : i32, i32, i32
  }
  func.func @transform_2(%arg0: i32) -> (i32, i32, i32) {
    %c0_i32 = arith.constant 0 : i32
    %c0_i32_0 = arith.constant 0 : i32
    %c0_i32_1 = arith.constant 0 : i32
    return %arg0, %c0_i32, %c0_i32_0 : i32, i32, i32
  }
  func.func @transform_3(%arg0: i32) -> (i32, i32) {
    %c0_i32 = arith.constant 0 : i32
    %c0_i32_0 = arith.constant 0 : i32
    %c0_i32_1 = arith.constant 0 : i32
    return %c0_i32, %c0_i32_0 : i32, i32
  }
  func.func @transform_4(%arg0: i32) -> (i32, i32) {
    %c0_i32 = arith.constant 0 : i32
    %c0_i32_0 = arith.constant 0 : i32
    %c0_i32_1 = arith.constant 0 : i32
    return %c0_i32, %c0_i32_0 : i32, i32
  }
  func.func @transform_5(%arg0: i32) -> (i32, i32, i32) {
    %c0_i32 = arith.constant 0 : i32
    %c0_i32_0 = arith.constant 0 : i32
    %c0_i32_1 = arith.constant 0 : i32
    return %arg0, %c0_i32, %c0_i32_0 : i32, i32, i32
  }
}

</mosaic_0001>

<llo_original>
// kernel: tpu_custom_call.1
$region0: #{tpu_custom_call.1}
  #allocation0 [shape = 'u32[]', space=smem, size = 0x4, offset = 0x4, fixed_abs, tag = 'smem constant byte address 0x4 - core index']
  #allocation1 [shape = 'u32[144,128]{1,0:T(1,128)}', space=vmem, size = 0x12000, scoped, tag = 'internal scratch']
  %s0 = inlined_call_operand.hbm [shape: f32[2,64], index: 0, kind: input, shape index: {}]
  %s1 = inlined_call_operand.hbm [shape: f32[4,64,128], index: 1, kind: input, shape index: {}]
  %s2 = inlined_call_operand.vmem [shape: f32[4,1,128], index: 2, kind: input, shape index: {}]
  %s3 = inlined_call_operand.vmem [shape: f32[1,128], index: 3, kind: input, shape index: {}]
  %s4 = inlined_call_operand.vmem [shape: f32[1,128], index: 4, kind: input, shape index: {}]
  %s5 = inlined_call_operand.hbm [shape: f32[4,2,128], index: 5, kind: output, shape index: {}]
  %s6 = sld [smem:[#allocation0]]
  $region61: #{tpu_custom_call.1} parent=0
    _
  %s8 = ssub.s32 1, %s6
  %s9 = scalar_select 0, %s8, %s6
  $region1: #{tpu_custom_call.1} parent=0
    #allocation2 [shape = 'u8[1024]{0}', space=vmem, size = 0x400, scoped, tag = 'input window, operand 0, single buffered']
    #allocation3 [shape = 's32[2]{0}', space=sflag, size = 0x8, scoped, tag = 'scoped memory for tpu_custom_call.1']
    #allocation4 [shape = 's32[2]{0}', space=sflag, size = 0x8, scoped, tag = 'scoped memory for tpu_custom_call.1']
    #allocation5 [shape = 'u8[65536]{0}', space=vmem, size = 0x10000, scoped, tag = 'input window, operand 1']
    #allocation6 [shape = 's32[2]{0}', space=sflag, size = 0x8, scoped, tag = 'scoped memory for tpu_custom_call.1']
    #allocation7 [shape = 'u8[2048]{0}', space=vmem, size = 0x800, scoped, tag = 'output window, operand 0']
    %10 = vsyncpa [#allocation3], 0
    %11 = vsyncpa [#allocation6], 0
    %s12 = scalar_lea.sflag [#allocation6], 1
    %13 = vsyncpa %s12, 0
    %14 = vsyncpa [#allocation4], 0
    %s15 = scalar_lea.sflag [#allocation4], 1
    %16 = vsyncpa %s15, 0
    loop: start=0, step=1, limit=6
    $region2: #{tpu_custom_call.1} parent=1 // loop_pre_header
      _
    $region3: #{tpu_custom_call.1} parent=1 // loop_header
      %s18 = sphi 0, %s22
      %p19 = scmp.ge.s32.totalorder %s18, 6
      %s26 = sphi 0, %s26
      %s28 = sphi 0, %s26
      %s29 = sphi 0, %s28
      %s43 = sphi 0, %s29
      %s49 = sphi 0, %s51
      %s52 = sphi 0, %s49
      %s53 = sphi 0, %s52
      %s69 = sphi 0, %s53
      %s75 = sphi 0, %s77
      %s78 = sphi 0, %s75
      %s79 = sphi 0, %s78
      %s95 = sphi 0, %s79
      %s99 = sphi 0, %s99
      %s101 = sphi 0, %s99
      %s102 = sphi 0, %s101
      %s116 = sphi 0, %s102
      %s120 = sphi 0, %s120
      %s122 = sphi 0, %s120
      %s123 = sphi 0, %s122
      %s137 = sphi 0, %s123
      %s143 = sphi 0, %s145
      %s146 = sphi 0, %s143
      %s147 = sphi 0, %s146
      %s163 = sphi 0, %s147
    $region4: #{tpu_custom_call.1} parent=1 // loop_header_branch
      %21 = sbr.rel (%p19) target = $region8
    $region5: #{tpu_custom_call.1} parent=1 // loop_body
      %s23 = ssub.s32 %s18, 1
      %s24 = ssub.s32 %s18, 2
      %s25 = sadd.s32 %s18, 1
      %s27 = sadd.s32 %s26, 1
      %p30 = scmp.eq.s32.totalorder %s18, 3
      %p31 = scmp.ne.s32.totalorder %s26, %s28
      %p32 = scmp.eq.s32.totalorder %s18, 0
      %p33 = por %p31, %p32
      %p34 = scmp.ne.s32.totalorder %s26, %s28
      %p35 = scmp.eq.s32.totalorder %s23, 3
      %p36 = por %p34, %p35
      %p37 = scmp.ne.s32.totalorder %s28, %s29
      %p38 = scmp.eq.s32.totalorder %s23, 0
      %p39 = por %p37, %p38
      %p40 = scmp.ne.s32.totalorder %s28, %s29
      %p41 = scmp.eq.s32.totalorder %s24, 3
      %p42 = por %p40, %p41
      %p44 = scmp.ne.s32.totalorder %s29, %s43
      %p45 = scmp.eq.s32.totalorder %s24, 0
      %p46 = por %p44, %p45
      %s47 = ssub.s32 %s18, %s25
      %p48 = scmp.eq.s32.totalorder %s47, 0
      %s50 = sadd.s32 %s49, 1
      %s51 = scalar_select %p48, %s49, %s50
      %p54 = pneg %p48
      %p55 = scmp.eq.s32.totalorder %s18, 3
      %p56 = por %p54, %p55
      %p57 = scmp.ne.s32.totalorder %s49, %s52
      %p58 = scmp.eq.s32.totalorder %s18, 0
      %p59 = por %p57, %p58
      %p60 = scmp.ne.s32.totalorder %s49, %s52
      %p61 = scmp.eq.s32.totalorder %s23, 3
      %p62 = por %p60, %p61
      %p63 = scmp.ne.s32.totalorder %s52, %s53
      %p64 = scmp.eq.s32.totalorder %s23, 0
      %p65 = por %p63, %p64
      %p66 = scmp.ne.s32.totalorder %s52, %s53
      %p67 = scmp.eq.s32.totalorder %s24, 3
      %p68 = por %p66, %p67
      %p70 = scmp.ne.s32.totalorder %s53, %s69
      %p71 = scmp.eq.s32.totalorder %s24, 0
      %p72 = por %p70, %p71
      %s73 = ssub.s32 %s18, %s25
      %p74 = scmp.eq.s32.totalorder %s73, 0
      %s76 = sadd.s32 %s75, 1
      %s77 = scalar_select %p74, %s75, %s76
      %p80 = pneg %p74
      %p81 = scmp.eq.s32.totalorder %s18, 3
      %p82 = por %p80, %p81
      %p83 = scmp.ne.s32.totalorder %s75, %s78
      %p84 = scmp.eq.s32.totalorder %s18, 0
      %p85 = por %p83, %p84
      %p86 = scmp.ne.s32.totalorder %s75, %s78
      %p87 = scmp.eq.s32.totalorder %s23, 3
      %p88 = por %p86, %p87
      %p89 = scmp.ne.s32.totalorder %s78, %s79
      %p90 = scmp.eq.s32.totalorder %s23, 0
      %p91 = por %p89, %p90
      %p92 = scmp.ne.s32.totalorder %s78, %s79
      %p93 = scmp.eq.s32.totalorder %s24, 3
      %p94 = por %p92, %p93
      %p96 = scmp.ne.s32.totalorder %s79, %s95
      %p97 = scmp.eq.s32.totalorder %s24, 0
      %p98 = por %p96, %p97
      %s100 = sadd.s32 %s99, 1
      %p103 = scmp.eq.s32.totalorder %s18, 3
      %p104 = scmp.ne.s32.totalorder %s99, %s101
      %p105 = scmp.eq.s32.totalorder %s18, 0
      %p106 = por %p104, %p105
      %p107 = scmp.ne.s32.totalorder %s99, %s101
      %p108 = scmp.eq.s32.totalorder %s23, 3
      %p109 = por %p107, %p108
      %p110 = scmp.ne.s32.totalorder %s101, %s102
      %p111 = scmp.eq.s32.totalorder %s23, 0
      %p112 = por %p110, %p111
      %p113 = scmp.ne.s32.totalorder %s101, %s102
      %p114 = scmp.eq.s32.totalorder %s24, 3
      %p115 = por %p113, %p114
      %p117 = scmp.ne.s32.totalorder %s102, %s116
      %p118 = scmp.eq.s32.totalorder %s24, 0
      %p119 = por %p117, %p118
      %s121 = sadd.s32 %s120, 1
      %p124 = scmp.eq.s32.totalorder %s18, 3
      %p125 = scmp.ne.s32.totalorder %s120, %s122
      %p126 = scmp.eq.s32.totalorder %s18, 0
      %p127 = por %p125, %p126
      %p128 = scmp.ne.s32.totalorder %s120, %s122
      %p129 = scmp.eq.s32.totalorder %s23, 3
      %p130 = por %p128, %p129
      %p131 = scmp.ne.s32.totalorder %s122, %s123
      %p132 = scmp.eq.s32.totalorder %s23, 0
      %p133 = por %p131, %p132
      %p134 = scmp.ne.s32.totalorder %s122, %s123
      %p135 = scmp.eq.s32.totalorder %s24, 3
      %p136 = por %p134, %p135
      %p138 = scmp.ne.s32.totalorder %s123, %s137
      %p139 = scmp.eq.s32.totalorder %s24, 0
      %p140 = por %p138, %p139
      %s141 = ssub.s32 %s18, %s25
      %p142 = scmp.eq.s32.totalorder %s141, 0
      %s144 = sadd.s32 %s143, 1
      %s145 = scalar_select %p142, %s143, %s144
      %p148 = pneg %p142
      %p149 = scmp.eq.s32.totalorder %s18, 3
      %p150 = por %p148, %p149
      %p151 = scmp.ne.s32.totalorder %s143, %s146
      %p152 = scmp.eq.s32.totalorder %s18, 0
      %p153 = por %p151, %p152
      %p154 = scmp.ne.s32.totalorder %s143, %s146
      %p155 = scmp.eq.s32.totalorder %s23, 3
      %p156 = por %p154, %p155
      %p157 = scmp.ne.s32.totalorder %s146, %s147
      %p158 = scmp.eq.s32.totalorder %s23, 0
      %p159 = por %p157, %p158
      %p160 = scmp.ne.s32.totalorder %s146, %s147
      %p161 = scmp.eq.s32.totalorder %s24, 3
      %p162 = por %p160, %p161
      %p164 = scmp.ne.s32.totalorder %s147, %s163
      %p165 = scmp.eq.s32.totalorder %s24, 0
      %p166 = por %p164, %p165
      %p167 = scmp.le.s32.totalorder 1, %s18
      %p168 = scmp.lt.s32.totalorder %s18, 5
      %p169 = pnand %p167, %p168
      %p170 = pneg %p169
      // Predicated region
      $region9: #{tpu_custom_call.1} parent=5 // pred_check
        _
      $region10: #{tpu_custom_call.1} parent=5 // pred_check_branch
        %172 = sbr.rel (%p169) target = $region12
      $region11: #{tpu_custom_call.1} parent=5 // pred_region
        %s173 = ssub.s32 %s18, 1
        // Predicated region
        $region13: #{tpu_custom_call.1} parent=11 // pred_check
          %p174 = pneg %p39
        $region14: #{tpu_custom_call.1} parent=11 // pred_check_branch
          %176 = sbr.rel (%p174) target = $region16
        $region15: #{tpu_custom_call.1} parent=11 // pred_region
          %s178 = ssub.s32 32, 32
          %179 = vsyncadd [#allocation3], %s178
          %s181 = sshll.u32 [#allocation2], 4
          %s182 = int_to_ptr.vmem [resolvable:$true] %s181
          %184 = dma.hbm_to_vmem [thread:$0]  %s0, 32, %s182, [#allocation3]
        $region16: #{tpu_custom_call.1} parent=11 // pred_fallthru
          _
        // Predicated region
        $region17: #{tpu_custom_call.1} parent=11 // pred_check
          %p185 = pneg %p112
        $region18: #{tpu_custom_call.1} parent=11 // pred_check_branch
          %187 = sbr.rel (%p185) target = $region20
        $region19: #{tpu_custom_call.1} parent=11 // pred_region
          _
        $region20: #{tpu_custom_call.1} parent=11 // pred_fallthru
          _
        // Predicated region
        $region21: #{tpu_custom_call.1} parent=11 // pred_check
          %p188 = pneg %p133
        $region22: #{tpu_custom_call.1} parent=11 // pred_check_branch
          %190 = sbr.rel (%p188) target = $region24
        $region23: #{tpu_custom_call.1} parent=11 // pred_region
          _
        $region24: #{tpu_custom_call.1} parent=11 // pred_fallthru
          _
      $region12: #{tpu_custom_call.1} parent=5 // pred_fallthru
        _
      %p191 = scmp.lt.s32.totalorder %s18, 4
      // Predicated region
      $region25: #{tpu_custom_call.1} parent=5 // pred_check
        %p192 = pneg %p191
      $region26: #{tpu_custom_call.1} parent=5 // pred_check_branch
        %194 = sbr.rel (%p192) target = $region28
      $region27: #{tpu_custom_call.1} parent=5 // pred_region
        // Predicated region
        $region29: #{tpu_custom_call.1} parent=27 // pred_check
          %p195 = pneg %p59
        $region30: #{tpu_custom_call.1} parent=27 // pred_check_branch
          %197 = sbr.rel (%p195) target = $region32
        $region31: #{tpu_custom_call.1} parent=27 // pred_region
          %s198 = sand.u32 %s49, 1
          %s199 = scalar_lea.sflag [#allocation6], %s198
          %s200 = sand.u32 %s49, 1
          %s201 = smul.addr %s200, 64
          %s202 = scalar_lea.vmem [#allocation5], %s201
          %s204 = ssub.s32 1024, 1024
          %205 = vsyncadd %s199, %s204
          %s206 = smul.addr %s18, 8
          %s207 = smul.addr %s206, 128
          %s208 = scalar_lea.hbm %s1, %s207
          %s209 = sshll.u32 %s202, 4
          %s210 = int_to_ptr.vmem [resolvable:$true] %s209
          %215 = dma.hbm_to_vmem [thread:$0]  %s208, 1024, %s210, %s199, 128, 128, 8
        $region32: #{tpu_custom_call.1} parent=27 // pred_fallthru
          _
        // Predicated region
        $region33: #{tpu_custom_call.1} parent=27 // pred_check
          %p216 = pneg %p85
        $region34: #{tpu_custom_call.1} parent=27 // pred_check_branch
          %218 = sbr.rel (%p216) target = $region36
        $region35: #{tpu_custom_call.1} parent=27 // pred_region
          %p219 = scmp.lt.s32.totalorder %s18, 3
          %s220 = scalar_select %p219, %s18, 3
          %s221 = scalar_lea.vmem %s2, %s220
        $region36: #{tpu_custom_call.1} parent=27 // pred_fallthru
          _
      $region28: #{tpu_custom_call.1} parent=5 // pred_fallthru
        _
      %p222 = scmp.le.s32.totalorder 1, %s18
      %p223 = scmp.lt.s32.totalorder %s18, 5
      %p224 = pnand %p222, %p223
      %p225 = pneg %p224
      // Predicated region
      $region37: #{tpu_custom_call.1} parent=5 // pred_check
        _
      $region38: #{tpu_custom_call.1} parent=5 // pred_check_branch
        %227 = sbr.rel (%p224) target = $region40
      $region39: #{tpu_custom_call.1} parent=5 // pred_region
        %s228 = ssub.s32 %s18, 1
        // Predicated region
        $region41: #{tpu_custom_call.1} parent=39 // pred_check
          %p229 = pneg %p39
        $region42: #{tpu_custom_call.1} parent=39 // pred_check_branch
          %231 = sbr.rel (%p229) target = $region44
        $region43: #{tpu_custom_call.1} parent=39 // pred_region
          %232 = dma.done [#allocation3], 32
        $region44: #{tpu_custom_call.1} parent=39 // pred_fallthru
          _
        %s233 = sand.u32 %s52, 1
        %s234 = scalar_lea.sflag [#allocation6], %s233
        %s235 = sand.u32 %s52, 1
        %s236 = smul.addr %s235, 64
        %s237 = scalar_lea.vmem [#allocation5], %s236
        // Predicated region
        $region45: #{tpu_custom_call.1} parent=39 // pred_check
          %p238 = pneg %p65
        $region46: #{tpu_custom_call.1} parent=39 // pred_check_branch
          %240 = sbr.rel (%p238) target = $region48
        $region47: #{tpu_custom_call.1} parent=39 // pred_region
          %241 = dma.done %s234, 1024
        $region48: #{tpu_custom_call.1} parent=39 // pred_fallthru
          _
        %p242 = pneg %p39
        %p243 = pneg %p36
        %s244 = sand.u32 %s52, 1
        %s245 = scalar_lea.sflag [#allocation6], %s244
        %s246 = sand.u32 %s52, 1
        %s247 = smul.addr %s246, 64
        %s248 = scalar_lea.vmem [#allocation5], %s247
        %p249 = pneg %p65
        %p250 = pneg %p62
        %p251 = scmp.lt.s32.totalorder %s23, 3
        %s252 = scalar_select %p251, %s23, 3
        %s253 = scalar_lea.vmem %s2, %s252
        %p254 = pneg %p91
        %p255 = pneg %p88
        %p256 = pneg %p112
        %p257 = pneg %p109
        %p258 = pneg %p133
        %p259 = pneg %p130
        %p260 = pneg %p159
        %p261 = pneg %p156
        %s262 = sand.u32 %s146, 1
        %s263 = scalar_lea.sflag [#allocation4], %s262
        %s264 = sand.u32 %s146, 1
        %s265 = smul.addr %s264, 2
        %s266 = scalar_lea.vmem [#allocation7], %s265
        %p267 = scmp.lt.s32.totalorder %s23, 3
        %s268 = scalar_select %p267, %s23, 3
        %s269 = scalar_lea.vmem %s2, %s268
        %v270 = vld [vmem:[#allocation2] sm:$0x3]
        %v271 = vld [vmem:[%s237] sm:$0xff]
        %v272 = vld [vmem:[%s237 + $0x8] sm:$0xff]
        %v273 = vld [vmem:[%s237 + $0x10] sm:$0xff]
        %v274 = vld [vmem:[%s237 + $0x18] sm:$0xff]
        %v275 = vld [vmem:[%s237 + $0x20] sm:$0xff]
        %v276 = vld [vmem:[%s237 + $0x28] sm:$0xff]
        %v277 = vld [vmem:[%s237 + $0x30] sm:$0xff]
        %v278 = vld [vmem:[%s237 + $0x38] sm:$0xff]
        %v279 = vld [vmem:[%s269] sm:$0x1]
        %v280 = vld [vmem:[%s3] sm:$0x1]
        %v281 = vld [vmem:[%s4] sm:$0x1]
        %v283 = vlaneseq
        %v284 = vshrl.u32 %v283, 7
        %v285 = vsub.s32 0, %v284
        %v286 = vrot.slane %v279, %v285
        %vm288 = vcmask 523264
        %v290 = vsel %vm288, %v270, 0
        %292 = vmatprep.subr.mxu0 0.0
        %293 = vmatpush1.msra.mxu0 %v271
        %294 = vmatprep.subr.mxu0 0.0
        %295 = vmatpush1.msra.mxu0 %v272
        %296 = vmatprep.subr.mxu0 0.0
        %297 = vmatpush1.msra.mxu0 %v273
        %298 = vmatprep.subr.mxu0 0.0
        %299 = vmatpush1.msra.mxu0 %v274
        %300 = vmatprep.subr.mxu0 0.0
        %301 = vmatpush1.msra.mxu0 %v275
        %302 = vmatprep.subr.mxu0 0.0
        %303 = vmatpush1.msra.mxu0 %v276
        %304 = vmatprep.subr.mxu0 0.0
        %305 = vmatpush1.msra.mxu0 %v277
        %306 = vmatprep.subr.mxu0 0.0
        %307 = vmatpush1.msra.mxu0 %v278
        %308 = vmatprep.subr.mxu0 0.0
        %309 = vmatpush1.msra.mxu0 0.0
        %310 = vmatprep.subr.mxu0 0.0
        %311 = vmatpush1.msra.mxu0 0.0
        %312 = vmatprep.subr.mxu0 0.0
        %313 = vmatpush1.msra.mxu0 0.0
        %314 = vmatprep.subr.mxu0 0.0
        %315 = vmatpush1.msra.mxu0 0.0
        %316 = vmatprep.subr.mxu0 0.0
        %317 = vmatpush1.msra.mxu0 0.0
        %318 = vmatprep.subr.mxu0 0.0
        %319 = vmatpush1.msra.mxu0 0.0
        %320 = vmatprep.subr.mxu0 0.0
        %321 = vmatpush1.msra.mxu0 0.0
        %322 = vmatprep.subr.mxu0 0.0
        %323 = vmatpush1.msra.mxu0 0.0
        %324 = vmatprep.subr.mxu0 0.0
        %325 = vmatpush1.msra.mxu0 0.0
        %326 = vmatprep.subr.mxu0 0.0
        %327 = vmatpush1.msra.mxu0 0.0
        %328 = vmatprep.subr.mxu0 0.0
        %329 = vmatpush1.msra.mxu0 0.0
        %330 = vmatprep.subr.mxu0 0.0
        %331 = vmatpush1.msra.mxu0 0.0
        %332 = vmatprep.subr.mxu0 0.0
        %333 = vmatpush1.msra.mxu0 0.0
        %334 = vmatprep.subr.mxu0 0.0
        %335 = vmatpush1.msra.mxu0 0.0
        %336 = vmatprep.subr.mxu0 0.0
        %337 = vmatpush1.msra.mxu0 0.0
        %338 = vmatprep.subr.mxu0 0.0
        %339 = vmatpush1.msra.mxu0 0.0
        %340 = vmatprep.subr.mxu0 0.0
        %341 = vmatpush1.msra.mxu0 0.0
        %342 = vmatprep.subr.mxu0 0.0
        %343 = vmatpush1.msra.mxu0 0.0
        %344 = vmatprep.subr.mxu0 0.0
        %345 = vmatpush1.msra.mxu0 0.0
        %346 = vmatprep.subr.mxu0 0.0
        %347 = vmatpush1.msra.mxu0 0.0
        %348 = vmatprep.subr.mxu0 0.0
        %349 = vmatpush1.msra.mxu0 0.0
        %350 = vmatprep.subr.mxu0 0.0
        %351 = vmatpush1.msra.mxu0 0.0
        %352 = vmatprep.subr.mxu0 0.0
        %353 = vmatpush1.msra.mxu0 0.0
        %354 = vmatprep.subr.mxu0 0.0
        %355 = vmatpush1.msra.mxu0 0.0
        %356 = vmatprep.mubr.f32.mxu0 0.0
        %357 = vmatmul.mubr.f32.gmra.mrb[0].mxu0 %v290
        %v358 = vpop.f32.mrb[0].mxu0
        %v359 = vadd.f32 %v286, %v358
        %v360 = vpop.f32.mrb[0].mxu0
        %361 = vdwg.mxu0
        %vm362 = vcmask 1041408
        %v363 = vsel %vm362, %v359, 0.0
        %364 = vadd.xlane.f32.xlu0 %v363
        %v365 = vpop.xlane.xlu0 %364
        %v366 = vmul.f32 %v365, 0.0078125
        %v367 = vmul.f32 %v359, %v359
        %v368 = vsel %vm362, %v367, 0.0
        %369 = vadd.xlane.f32.xlu0 %v368
        %v370 = vpop.xlane.xlu0 %369
        %v371 = vmul.f32 %v370, 0.0078125
        %v372 = vmul.f32 %v366, %v366
        %v373 = vsub.f32 %v371, %v372
        %v374 = vadd.f32 %v373, 1e-05
        %v375 = vrsqrt.pop %v374
        %v377 = vlaneseq
        %v378 = vshrl.u32 %v377, 7
        %v379 = vsub.s32 0, %v378
        %v380 = vrot.slane %v280, %v379
        %v382 = vmul.f32 %v380, %v375
        %v383 = vmul.f32 %v366, %v382
        %v385 = vlaneseq
        %v386 = vshrl.u32 %v385, 7
        %v387 = vsub.s32 0, %v386
        %v388 = vrot.slane %v281, %v387
        %v390 = vsub.f32 %v388, %v383
        %v391 = vmul.f32 %v359, %v382
        %v392 = vadd.f32 %v391, %v390
        %393 = vst [vmem:[%s266] sm:$0x3] %v392
        %s394 = sand.u32 %s146, 1
        %s395 = scalar_lea.sflag [#allocation4], %s394
        %s396 = sand.u32 %s146, 1
        %s397 = smul.addr %s396, 2
        %s398 = scalar_lea.vmem [#allocation7], %s397
        // Predicated region
        $region49: #{tpu_custom_call.1} parent=39 // pred_check
          %p399 = pneg %p156
        $region50: #{tpu_custom_call.1} parent=39 // pred_check_branch
          %401 = sbr.rel (%p399) target = $region52
        $region51: #{tpu_custom_call.1} parent=39 // pred_region
          %s403 = ssub.s32 32, 32
          %404 = vsyncadd %s395, %s403
          %s405 = smul.addr %s23, 32
          %s406 = scalar_lea.hbm %s5, %s405
          %s408 = sshll.u32 %s398, 4
          %s409 = int_to_ptr.vmem [resolvable:$true] %s408
          %411 = dma.vmem_to_hbm [thread:$0]  %s409, 32, %s406, %s395
        $region52: #{tpu_custom_call.1} parent=39 // pred_fallthru
          _
      $region40: #{tpu_custom_call.1} parent=5 // pred_fallthru
        _
      %p412 = scmp.le.s32.totalorder 2, %s18
      // Predicated region
      $region53: #{tpu_custom_call.1} parent=5 // pred_check
        %p413 = pneg %p412
      $region54: #{tpu_custom_call.1} parent=5 // pred_check_branch
        %415 = sbr.rel (%p413) target = $region56
      $region55: #{tpu_custom_call.1} parent=5 // pred_region
        %s416 = ssub.s32 %s18, 2
        // Predicated region
        $region57: #{tpu_custom_call.1} parent=55 // pred_check
          %p417 = pneg %p162
        $region58: #{tpu_custom_call.1} parent=55 // pred_check_branch
          %419 = sbr.rel (%p417) target = $region60
        $region59: #{tpu_custom_call.1} parent=55 // pred_region
          %s420 = sand.u32 %s147, 1
          %s421 = scalar_lea.sflag [#allocation4], %s420
          %s422 = sand.u32 %s147, 1
          %s423 = smul.addr %s422, 2
          %s424 = scalar_lea.vmem [#allocation7], %s423
          %425 = dma.done %s421, 32
        $region60: #{tpu_custom_call.1} parent=55 // pred_fallthru
          _
      $region56: #{tpu_custom_call.1} parent=5 // pred_fallthru
        _
    $region6: #{tpu_custom_call.1} parent=1 // loop_footer
      %s22 = sadd.s32 1, %s18
    $region7: #{tpu_custom_call.1} parent=1 // loop_footer_branch
      %17 = sbr.rel target = $region3
    $region8: #{tpu_custom_call.1} parent=1 // loop_exit
      _
    %426 = vsyncpa [#allocation3], 1
    %s427 = scalar_lea.sflag [#allocation3], 1
    %428 = vsyncpa %s427, 1
    %429 = vsyncpa [#allocation6], 1
    %s430 = scalar_lea.sflag [#allocation6], 1
    %431 = vsyncpa %s430, 1
    %432 = vsyncpa [#allocation4], 1
    %s433 = scalar_lea.sflag [#allocation4], 1
    %434 = vsyncpa %s433, 1

</llo_original>
